<compile_context>
chip_gen: v6e
topology: v6e:2x2x1
jax: 0.10.0
libtpu: 0.0.40
codegen_flags: <defaults>
</compile_context>

<pallas_src>
import math
import numpy as np
import jax
import jax.numpy as jnp
from jax.experimental import pallas as pl
from jax.experimental.pallas import tpu as pltpu

_HALF_LOG_2PI = 0.5 * math.log(2.0 * math.pi)


def _subspace_classifier_kernel(outs_ref, dirs_dk_ref, a_t_ref, b_t_ref, const_ref, o_ref):
    # outs_ref: (TB, D)   streamed over the batch grid
    # dirs_dk_ref: (D, K) resident, pre-normalized, (contract, N) orientation
    # a_t_ref/b_t_ref: (K, C) resident coefficient matrices
    # const_ref: (1, C)   resident per-class constant
    # o_ref: (TB, C)

    # Projection on the MXU: (TB, D) @ (D, K) -> (TB, K), f32 accumulation.
    proj = jnp.dot(outs_ref[...], dirs_dk_ref[...], preferred_element_type=jnp.float32)

    # Gaussian scoring as a quadratic form (coefficients precomputed in wrapper):
    #   log_probs = (p*p) @ a_t + p @ b_t + const_row
    log_probs = (
        jnp.dot(proj * proj, a_t_ref[...], preferred_element_type=jnp.float32)
        + jnp.dot(proj, b_t_ref[...], preferred_element_type=jnp.float32)
        + const_ref[...]
    )                                                                    # (TB, C)

    # log_softmax over classes (f32 throughout the epilogue).
    m = jnp.max(log_probs, axis=-1, keepdims=True)
    shifted = log_probs - m
    lse = jnp.log(jnp.sum(jnp.exp(shifted), axis=-1, keepdims=True))
    o_ref[...] = (shifted - lse).astype(o_ref.dtype)


def _round_up(x, m):
    return ((x + m - 1) // m) * m


def _choose_block_b(B, D, itemsize, *, target_tile_bytes, min_grid_steps):
    """Byte-targeted batch tile, rounded to sublane multiples."""
    sublane = 8 if itemsize >= 4 else (16 if itemsize == 2 else 32)
    # Rows per tile targeting ~target_tile_bytes of the streamed `outs` array.
    rows = max(sublane, (target_tile_bytes // max(1, D * itemsize)) // sublane * sublane)
    # Keep >= min_grid_steps grid steps when B allows it (so v7x's two
    # TensorCores both get work on the "parallel" batch axis).
    rows_for_steps = max(sublane, _round_up(pl.cdiv(B, min_grid_steps), sublane))
    rows = min(rows, rows_for_steps)
    # Never larger than the whole (sublane-rounded) batch.
    rows = min(rows, _round_up(B, sublane))
    return int(rows)


def subspace_classifier_forward(
    outs,
    classifier_dirs,
    means,
    log_stds,
    *,
    block_b=None,
    mxu_dtype=jnp.float32,       # set jnp.bfloat16 on v6e/v7x to halve HBM traffic
    target_tile_bytes=8 << 20,   # ~8 MiB `outs` tile per buffer
    min_grid_steps=2,            # keep both v7x TensorCores busy when B allows
    vmem_limit_bytes=48 << 20,   # > v5e's 16 MiB default, <= v7x's 64 MiB physical
    outs_buffers=None,           # e.g. 3 to sweep pipeline depth on `outs`
):
    """outs: (B, D), classifier_dirs: (K, D), means/log_stds: (C, K) -> (B, C)."""
    B, D = outs.shape
    C, K = means.shape
    assert classifier_dirs.shape == (K, D)
    assert log_stds.shape == (C, K)

    # ---- Grid-invariant prologue (hoisted out of the kernel; all tiny) ----
    dirs_f32 = jnp.asarray(classifier_dirs, jnp.float32)                 # (K, D)
    inv_norm = jax.lax.rsqrt(jnp.sum(dirs_f32 * dirs_f32, axis=-1, keepdims=True))
    dirs_dk = (dirs_f32 * inv_norm).T.astype(mxu_dtype)                  # (D, K), normalized

    means_f32 = jnp.asarray(means, jnp.float32)                          # (C, K)
    log_stds_f32 = jnp.asarray(log_stds, jnp.float32)                    # (C, K)
    inv2var = 0.5 * jnp.exp(-2.0 * log_stds_f32)                         # (C, K) = 1/(2*sigma^2)

    a_t = (-inv2var).T                                                   # (K, C)
    b_t = (2.0 * means_f32 * inv2var).T                                  # (K, C)
    const_row = (
        -jnp.sum(means_f32 * means_f32 * inv2var + log_stds_f32, axis=-1, keepdims=True)
        - K * _HALF_LOG_2PI
    ).T                                                                  # (1, C)

    outs = outs.astype(mxu_dtype)
    itemsize = jnp.dtype(mxu_dtype).itemsize

    if block_b is None:
        block_b = _choose_block_b(
            B, D, itemsize,
            target_tile_bytes=target_tile_bytes,
            min_grid_steps=min_grid_steps,
        )

    # No jnp.pad / slice round trip: Pallas masks the ragged last batch block.
    grid = (pl.cdiv(B, block_b),)

    outs_spec_kwargs = {}
    if outs_buffers is not None:
        outs_spec_kwargs["pipeline_mode"] = pl.Buffered(int(outs_buffers))

    flops = 2 * B * D * K + B * K + 4 * B * K * C + 5 * B * C
    transcendentals = B * C + B
    bytes_accessed = (
        B * D * itemsize + D * K * itemsize + 4 * (2 * K * C + C + B * C)
    )

    out = pl.pallas_call(
        _subspace_classifier_kernel,
        out_shape=jax.ShapeDtypeStruct((B, C), jnp.float32),
        grid_spec=pltpu.PrefetchScalarGridSpec(
            num_scalar_prefetch=0,
            grid=grid,
            in_specs=[
                pl.BlockSpec((block_b, D), lambda i: (i, 0), **outs_spec_kwargs),  # streamed
                pl.BlockSpec((D, K), lambda i: (0, 0)),                            # resident
                pl.BlockSpec((K, C), lambda i: (0, 0)),                            # resident
                pl.BlockSpec((K, C), lambda i: (0, 0)),                            # resident
                pl.BlockSpec((1, C), lambda i: (0, 0)),                            # resident
            ],
            out_specs=pl.BlockSpec((block_b, C), lambda i: (i, 0)),
        ),
        compiler_params=pltpu.CompilerParams(
            dimension_semantics=("parallel",),
            vmem_limit_bytes=vmem_limit_bytes,
        ),
        cost_estimate=pl.CostEstimate(
            flops=flops,
            transcendentals=transcendentals,
            bytes_accessed=bytes_accessed,
        ),
    )(outs, dirs_dk, a_t, b_t, const_row)

    return out


def reference_forward(outs, classifier_dirs, means, log_stds):
    """Pure-JAX reference mirroring the PyTorch module."""
    normed = classifier_dirs / jnp.linalg.norm(classifier_dirs, axis=1, keepdims=True)
    proj = outs @ normed.T                                             # (B, K)
    demeaned = proj[:, None, :] - means[None, :, :]                    # (B, C, K)
    unnormed = -(demeaned ** 2) / (2.0 * jnp.exp(2.0 * log_stds)[None])
    lp = unnormed - log_stds[None] - 0.5 * math.log(2.0 * math.pi)
    log_probs = jnp.sum(lp, axis=-1)                                   # (B, C)
    return jax.nn.log_softmax(log_probs, axis=-1)


if __name__ == "__main__":
    # Small shapes consistent with the module's forward:
    #   n_dims = (4, 16) -> 64 flattened features, n_directions = 16, n_classes = 4
    batch = 8
    n_dims_total = 64
    n_directions = 16
    n_classes = 4

    key = jax.random.PRNGKey(0)
    k_outs, k_dirs, k_means, k_lstd = jax.random.split(key, 4)

    # Inputs ("outs" from the upstream network, already flattened to (B, D)).
    outs = jax.random.normal(k_outs, (batch, n_dims_total), dtype=jnp.float32)

    # Parameters (deterministic synthetic init):
    # TODO(synk): sample_directions(..., orthogonalize=True) is host-side parameter
    # init; emulated here via QR-orthogonalized Gaussian rows (not part of forward).
    raw = jax.random.normal(k_dirs, (n_dims_total, n_dims_total), dtype=jnp.float32)
    q, _ = jnp.linalg.qr(raw)
    classifier_dirs = q[:n_directions, :]                              # (K, D)
    # means / log_stds are zeros in __init__; small random values keep the
    # output non-degenerate (shapes match the module).
    means = 0.1 * jax.random.normal(k_means, (n_classes, n_directions), dtype=jnp.float32)
    log_stds = 0.05 * jax.random.normal(k_lstd, (n_classes, n_directions), dtype=jnp.float32)

    out = subspace_classifier_forward(outs, classifier_dirs, means, log_stds)
    out = jax.block_until_ready(out)

    ref = reference_forward(outs, classifier_dirs, means, log_stds)
    np.testing.assert_allclose(np.asarray(out), np.asarray(ref), rtol=1e-5, atol=1e-5)

    print("KERNEL_OK")
</pallas_src>

<mosaic_0001>
module attributes {stable_mosaic.version = 11 : i64} {
  func.func @_subspace_classifier_kernel(%arg0: i32, %arg1: memref<8x64xf32, #tpu.memory_space<vmem>>, %arg2: memref<64x16xf32, #tpu.memory_space<vmem>>, %arg3: memref<16x4xf32, #tpu.memory_space<vmem>>, %arg4: memref<16x4xf32, #tpu.memory_space<vmem>>, %arg5: memref<1x4xf32, #tpu.memory_space<vmem>>, %arg6: memref<8x4xf32, #tpu.memory_space<vmem>>) attributes {dimension_semantics = [#tpu.dimension_semantics<parallel>], iteration_bounds = array<i64: 1>, scalar_prefetch = 0 : i64, scratch_operands = 0 : i64, tpu.core_type = #tpu.core_type<tc>, window_params = [{transform_indices = @transform_0, window_bounds = array<i64: 8, 64>}, {pipeline_mode = #tpu.pipeline_mode<synchronous>, transform_indices = @transform_1, window_bounds = array<i64: 64, 16>}, {pipeline_mode = #tpu.pipeline_mode<synchronous>, transform_indices = @transform_2, window_bounds = array<i64: 16, 4>}, {pipeline_mode = #tpu.pipeline_mode<synchronous>, transform_indices = @transform_3, window_bounds = array<i64: 16, 4>}, {pipeline_mode = #tpu.pipeline_mode<synchronous>, transform_indices = @transform_4, window_bounds = array<i64: 1, 4>}, {transform_indices = @transform_5, window_bounds = array<i64: 8, 4>}]} {
    %c0 = arith.constant 0 : index
    %c0_0 = arith.constant 0 : index
    %0 = vector.load %arg1[%c0, %c0_0] : memref<8x64xf32, #tpu.memory_space<vmem>>, vector<8x64xf32>
    %c0_1 = arith.constant 0 : index
    %c0_2 = arith.constant 0 : index
    %1 = vector.load %arg2[%c0_1, %c0_2] : memref<64x16xf32, #tpu.memory_space<vmem>>, vector<64x16xf32>
    %cst = arith.constant dense<0.000000e+00> : vector<8x16xf32>
    %2 = tpu.matmul %0, %1, %cst {dimension_numbers = #tpu.dot_dimension_numbers<[1], [0], [0], [1], [0, 0, 1, 1], [], []>} : vector<8x64xf32>, vector<64x16xf32>, vector<8x16xf32> -> vector<8x16xf32>
    %3 = arith.mulf %2, %2 : vector<8x16xf32>
    %c0_3 = arith.constant 0 : index
    %c0_4 = arith.constant 0 : index
    %4 = vector.load %arg3[%c0_3, %c0_4] : memref<16x4xf32, #tpu.memory_space<vmem>>, vector<16x4xf32>
    %cst_5 = arith.constant dense<0.000000e+00> : vector<8x4xf32>
    %5 = tpu.matmul %3, %4, %cst_5 {dimension_numbers = #tpu.dot_dimension_numbers<[1], [0], [0], [1], [0, 0, 1, 1], [], []>} : vector<8x16xf32>, vector<16x4xf32>, vector<8x4xf32> -> vector<8x4xf32>
    %c0_6 = arith.constant 0 : index
    %c0_7 = arith.constant 0 : index
    %6 = vector.load %arg4[%c0_6, %c0_7] : memref<16x4xf32, #tpu.memory_space<vmem>>, vector<16x4xf32>
    %cst_8 = arith.constant dense<0.000000e+00> : vector<8x4xf32>
    %7 = tpu.matmul %2, %6, %cst_8 {dimension_numbers = #tpu.dot_dimension_numbers<[1], [0], [0], [1], [0, 0, 1, 1], [], []>} : vector<8x16xf32>, vector<16x4xf32>, vector<8x4xf32> -> vector<8x4xf32>
    %8 = arith.addf %5, %7 : vector<8x4xf32>
    %c0_9 = arith.constant 0 : index
    %c0_10 = arith.constant 0 : index
    %9 = vector.load %arg5[%c0_9, %c0_10] : memref<1x4xf32, #tpu.memory_space<vmem>>, vector<1x4xf32>
    %10 = vector.broadcast %9 : vector<1x4xf32> to vector<8x4xf32>
    %11 = arith.addf %8, %10 : vector<8x4xf32>
    %cst_11 = arith.constant dense<0xFF800000> : vector<8xf32>
    %12 = vector.multi_reduction <maximumf>, %11, %cst_11 [1] : vector<8x4xf32> to vector<8xf32>
    %13 = vector.shape_cast %12 : vector<8xf32> to vector<8x1xf32>
    %14 = vector.broadcast %13 : vector<8x1xf32> to vector<8x4xf32>
    %15 = arith.subf %11, %14 : vector<8x4xf32>
    %16 = math.exp %15 : vector<8x4xf32>
    %cst_12 = arith.constant dense<0.000000e+00> : vector<8xf32>
    %17 = vector.multi_reduction <add>, %16, %cst_12 [1] : vector<8x4xf32> to vector<8xf32>
    %18 = vector.shape_cast %17 : vector<8xf32> to vector<8x1xf32>
    %19 = math.log %18 : vector<8x1xf32>
    %20 = vector.broadcast %19 : vector<8x1xf32> to vector<8x4xf32>
    %21 = arith.subf %15, %20 : vector<8x4xf32>
    %c0_13 = arith.constant 0 : index
    %c0_14 = arith.constant 0 : index
    %22 = vector.load %arg6[%c0_13, %c0_14] : memref<8x4xf32, #tpu.memory_space<vmem>>, vector<8x4xf32>
    tpu.vector_store %arg6[%c0_13, %c0_14], %21 {strides = array<i32>} : memref<8x4xf32, #tpu.memory_space<vmem>>, vector<8x4xf32>,
    return
  }
  func.func @transform_0(%arg0: i32) -> (i32, i32) {
    %c0_i32 = arith.constant 0 : i32
    %c0_i32_0 = arith.constant 0 : i32
    return %arg0, %c0_i32 : i32, i32
  }
  func.func @transform_1(%arg0: i32) -> (i32, i32) {
    %c0_i32 = arith.constant 0 : i32
    %c0_i32_0 = arith.constant 0 : i32
    %c0_i32_1 = arith.constant 0 : i32
    return %c0_i32, %c0_i32_0 : i32, i32
  }
  func.func @transform_2(%arg0: i32) -> (i32, i32) {
    %c0_i32 = arith.constant 0 : i32
    %c0_i32_0 = arith.constant 0 : i32
    %c0_i32_1 = arith.constant 0 : i32
    return %c0_i32, %c0_i32_0 : i32, i32
  }
  func.func @transform_3(%arg0: i32) -> (i32, i32) {
    %c0_i32 = arith.constant 0 : i32
    %c0_i32_0 = arith.constant 0 : i32
    %c0_i32_1 = arith.constant 0 : i32
    return %c0_i32, %c0_i32_0 : i32, i32
  }
  func.func @transform_4(%arg0: i32) -> (i32, i32) {
    %c0_i32 = arith.constant 0 : i32
    %c0_i32_0 = arith.constant 0 : i32
    %c0_i32_1 = arith.constant 0 : i32
    return %c0_i32, %c0_i32_0 : i32, i32
  }
  func.func @transform_5(%arg0: i32) -> (i32, i32) {
    %c0_i32 = arith.constant 0 : i32
    %c0_i32_0 = arith.constant 0 : i32
    return %arg0, %c0_i32 : i32, i32
  }
}

</mosaic_0001>

<llo_original>
// kernel: tpu_custom_call.1
$region0: #{tpu_custom_call.1}
  #allocation0 [shape = 'u32[]', space=smem, size = 0x4, offset = 0x4, fixed_abs, tag = 'smem constant byte address 0x4 - core index']
  #allocation1 [shape = 'u32[144,128]{1,0:T(1,128)}', space=vmem, size = 0x12000, scoped, tag = 'internal scratch']
  %s0 = inlined_call_operand.vmem [shape: f32[8,64], index: 0, kind: input, shape index: {}]
  %s1 = inlined_call_operand.vmem [shape: f32[64,16], index: 1, kind: input, shape index: {}]
  %s2 = inlined_call_operand.vmem [shape: f32[16,4], index: 2, kind: input, shape index: {}]
  %s3 = inlined_call_operand.vmem [shape: f32[16,4], index: 3, kind: input, shape index: {}]
  %s4 = inlined_call_operand.vmem [shape: f32[1,4], index: 4, kind: input, shape index: {}]
  %s5 = inlined_call_operand.vmem [shape: f32[8,4], index: 5, kind: output, shape index: {}]
  %s6 = sld [smem:[#allocation0]]
  $region30: #{tpu_custom_call.1} parent=0
    _
  %s8 = ssub.s32 1, %s6
  %s9 = scalar_select 0, %s8, %s6
  // Predicated region
  $region2: #{tpu_custom_call.1} parent=0 // pred_check
    _
  $region3: #{tpu_custom_call.1} parent=0 // pred_check_branch
    %11 = sbr.rel (0) target = $region5
  $region4: #{tpu_custom_call.1} parent=0 // pred_region
    _
  $region5: #{tpu_custom_call.1} parent=0 // pred_fallthru
    _
  // Predicated region
  $region6: #{tpu_custom_call.1} parent=0 // pred_check
    _
  $region7: #{tpu_custom_call.1} parent=0 // pred_check_branch
    %13 = sbr.rel (0) target = $region9
  $region8: #{tpu_custom_call.1} parent=0 // pred_region
    _
  $region9: #{tpu_custom_call.1} parent=0 // pred_fallthru
    _
  // Predicated region
  $region10: #{tpu_custom_call.1} parent=0 // pred_check
    _
  $region11: #{tpu_custom_call.1} parent=0 // pred_check_branch
    %15 = sbr.rel (0) target = $region13
  $region12: #{tpu_custom_call.1} parent=0 // pred_region
    _
  $region13: #{tpu_custom_call.1} parent=0 // pred_fallthru
    _
  // Predicated region
  $region14: #{tpu_custom_call.1} parent=0 // pred_check
    _
  $region15: #{tpu_custom_call.1} parent=0 // pred_check_branch
    %17 = sbr.rel (0) target = $region17
  $region16: #{tpu_custom_call.1} parent=0 // pred_region
    _
  $region17: #{tpu_custom_call.1} parent=0 // pred_fallthru
    _
  // Predicated region
  $region18: #{tpu_custom_call.1} parent=0 // pred_check
    _
  $region19: #{tpu_custom_call.1} parent=0 // pred_check_branch
    %19 = sbr.rel (0) target = $region21
  $region20: #{tpu_custom_call.1} parent=0 // pred_region
    _
  $region21: #{tpu_custom_call.1} parent=0 // pred_fallthru
    _
  %v20 = vld [vmem:[%s0] sm:$0xff]
  %v21 = vld [vmem:[%s1] sm:$0xff]
  %v22 = vld [vmem:[%s1 + $0x8] sm:$0xff]
  %v23 = vld [vmem:[%s1 + $0x10] sm:$0xff]
  %v24 = vld [vmem:[%s1 + $0x18] sm:$0xff]
  %v25 = vld [vmem:[%s1 + $0x20] sm:$0xff]
  %v26 = vld [vmem:[%s1 + $0x28] sm:$0xff]
  %v27 = vld [vmem:[%s1 + $0x30] sm:$0xff]
  %v28 = vld [vmem:[%s1 + $0x38] sm:$0xff]
  %vm29 = vcmask 523264
  %v31 = vsel %vm29, %v20, 0
  %33 = vmatprep.subr.mxu0 0.0
  %34 = vmatpush1.msra.mxu0 0.0
  %35 = vmatprep.subr.mxu0 0.0
  %36 = vmatpush1.msra.mxu0 0.0
  %37 = vmatprep.subr.mxu0 0.0
  %38 = vmatpush1.msra.mxu0 0.0
  %39 = vmatprep.subr.mxu0 0.0
  %40 = vmatpush1.msra.mxu0 0.0
  %41 = vmatprep.subr.mxu0 0.0
  %42 = vmatpush1.msra.mxu0 0.0
  %43 = vmatprep.subr.mxu0 0.0
  %44 = vmatpush1.msra.mxu0 0.0
  %45 = vmatprep.subr.mxu0 0.0
  %46 = vmatpush1.msra.mxu0 0.0
  %47 = vmatprep.subr.mxu0 0.0
  %48 = vmatpush1.msra.mxu0 0.0
  %49 = vmatprep.subr.mxu0 0.0
  %50 = vmatpush1.msra.mxu0 %v28
  %51 = vmatprep.subr.mxu0 0.0
  %52 = vmatpush1.msra.mxu0 %v27
  %53 = vmatprep.subr.mxu0 0.0
  %54 = vmatpush1.msra.mxu0 %v26
  %55 = vmatprep.subr.mxu0 0.0
  %56 = vmatpush1.msra.mxu0 %v25
  %57 = vmatprep.subr.mxu0 0.0
  %58 = vmatpush1.msra.mxu0 %v24
  %59 = vmatprep.subr.mxu0 0.0
  %60 = vmatpush1.msra.mxu0 %v23
  %61 = vmatprep.subr.mxu0 0.0
  %62 = vmatpush1.msra.mxu0 %v22
  %63 = vmatprep.subr.mxu0 0.0
  %64 = vmatpush1.msra.mxu0 %v21
  %65 = vmatprep.subr.mxu0 0.0
  %66 = vmatpush2.msra.mxu0 0.0
  %67 = vmatprep.subr.mxu0 0.0
  %68 = vmatpush2.msra.mxu0 0.0
  %69 = vmatprep.subr.mxu0 0.0
  %70 = vmatpush2.msra.mxu0 0.0
  %71 = vmatprep.subr.mxu0 0.0
  %72 = vmatpush2.msra.mxu0 0.0
  %73 = vmatprep.subr.mxu0 0.0
  %74 = vmatpush2.msra.mxu0 0.0
  %75 = vmatprep.subr.mxu0 0.0
  %76 = vmatpush2.msra.mxu0 0.0
  %77 = vmatprep.subr.mxu0 0.0
  %78 = vmatpush2.msra.mxu0 0.0
  %79 = vmatprep.subr.mxu0 0.0
  %80 = vmatpush2.msra.mxu0 0.0
  %81 = vmatprep.subr.mxu0 0.0
  %82 = vmatpush2.msra.mxu0 0.0
  %83 = vmatprep.subr.mxu0 0.0
  %84 = vmatpush2.msra.mxu0 0.0
  %85 = vmatprep.subr.mxu0 0.0
  %86 = vmatpush2.msra.mxu0 0.0
  %87 = vmatprep.subr.mxu0 0.0
  %88 = vmatpush2.msra.mxu0 0.0
  %89 = vmatprep.subr.mxu0 0.0
  %90 = vmatpush2.msra.mxu0 0.0
  %91 = vmatprep.subr.mxu0 0.0
  %92 = vmatpush2.msra.mxu0 0.0
  %93 = vmatprep.subr.mxu0 0.0
  %94 = vmatpush2.msra.mxu0 0.0
  %95 = vmatprep.subr.mxu0 0.0
  %96 = vmatpush2.msra.mxu0 0.0
  %97 = vmatprep.mubr.f32.mxu0 0.0
  %98 = vmatmul.mubr.f32.gmra.mxu0 %v31
  %v99 = vpop.f32.mrf.mxu0
  %v100 = vadd.f32 0.0, %v99
  %v101 = vpop.f32.mrf.mxu0
  %102 = vdwg.mxu0
  %v103 = vmul.f32 %v100, %v100
  %v104 = vld [vmem:[%s2] sm:$0xff]
  %v105 = vld [vmem:[%s2 + $0x8] sm:$0xff]
  %v106 = vld [vmem:[%s3] sm:$0xff]
  %v107 = vld [vmem:[%s3 + $0x8] sm:$0xff]
  %vm108 = vcmask 130048
  %v110 = vsel %vm108, %v100, 0
  %112 = vmatprep.subr.mxu0 0.0
  %113 = vmatpush1.msra.mxu0 0.0
  %114 = vmatprep.subr.mxu0 0.0
  %115 = vmatpush1.msra.mxu0 0.0
  %116 = vmatprep.subr.mxu0 0.0
  %117 = vmatpush1.msra.mxu0 0.0
  %118 = vmatprep.subr.mxu0 0.0
  %119 = vmatpush1.msra.mxu0 0.0
  %120 = vmatprep.subr.mxu0 0.0
  %121 = vmatpush1.msra.mxu0 0.0
  %122 = vmatprep.subr.mxu0 0.0
  %123 = vmatpush1.msra.mxu0 0.0
  %124 = vmatprep.subr.mxu0 0.0
  %125 = vmatpush1.msra.mxu0 0.0
  %126 = vmatprep.subr.mxu0 0.0
  %127 = vmatpush1.msra.mxu0 0.0
  %128 = vmatprep.subr.mxu0 0.0
  %129 = vmatpush1.msra.mxu0 0.0
  %130 = vmatprep.subr.mxu0 0.0
  %131 = vmatpush1.msra.mxu0 0.0
  %132 = vmatprep.subr.mxu0 0.0
  %133 = vmatpush1.msra.mxu0 0.0
  %134 = vmatprep.subr.mxu0 0.0
  %135 = vmatpush1.msra.mxu0 0.0
  %136 = vmatprep.subr.mxu0 0.0
  %137 = vmatpush1.msra.mxu0 0.0
  %138 = vmatprep.subr.mxu0 0.0
  %139 = vmatpush1.msra.mxu0 0.0
  %140 = vmatprep.subr.mxu0 0.0
  %141 = vmatpush1.msra.mxu0 %v107
  %142 = vmatprep.subr.mxu0 0.0
  %143 = vmatpush1.msra.mxu0 %v106
  %144 = vmatprep.subr.mxu0 0.0
  %145 = vmatpush2.msra.mxu0 0.0
  %146 = vmatprep.subr.mxu0 0.0
  %147 = vmatpush2.msra.mxu0 0.0
  %148 = vmatprep.subr.mxu0 0.0
  %149 = vmatpush2.msra.mxu0 0.0
  %150 = vmatprep.subr.mxu0 0.0
  %151 = vmatpush2.msra.mxu0 0.0
  %152 = vmatprep.subr.mxu0 0.0
  %153 = vmatpush2.msra.mxu0 0.0
  %154 = vmatprep.subr.mxu0 0.0
  %155 = vmatpush2.msra.mxu0 0.0
  %156 = vmatprep.subr.mxu0 0.0
  %157 = vmatpush2.msra.mxu0 0.0
  %158 = vmatprep.subr.mxu0 0.0
  %159 = vmatpush2.msra.mxu0 0.0
  %160 = vmatprep.subr.mxu0 0.0
  %161 = vmatpush2.msra.mxu0 0.0
  %162 = vmatprep.subr.mxu0 0.0
  %163 = vmatpush2.msra.mxu0 0.0
  %164 = vmatprep.subr.mxu0 0.0
  %165 = vmatpush2.msra.mxu0 0.0
  %166 = vmatprep.subr.mxu0 0.0
  %167 = vmatpush2.msra.mxu0 0.0
  %168 = vmatprep.subr.mxu0 0.0
  %169 = vmatpush2.msra.mxu0 0.0
  %170 = vmatprep.subr.mxu0 0.0
  %171 = vmatpush2.msra.mxu0 0.0
  %172 = vmatprep.subr.mxu0 0.0
  %173 = vmatpush2.msra.mxu0 0.0
  %174 = vmatprep.subr.mxu0 0.0
  %175 = vmatpush2.msra.mxu0 0.0
  %176 = vmatprep.mubr.f32.mxu0 0.0
  %177 = vmatmul.mubr.f32.gmra.mxu0 %v110
  %v178 = vpop.f32.mrf.mxu0
  %v179 = vadd.f32 0.0, %v178
  %v180 = vpop.f32.mrf.mxu0
  %181 = vdwg.mxu0
  %v183 = vsel %vm108, %v103, 0
  %185 = vmatprep.subr.mxu0 0.0
  %186 = vmatpush1.msra.mxu0 0.0
  %187 = vmatprep.subr.mxu0 0.0
  %188 = vmatpush1.msra.mxu0 0.0
  %189 = vmatprep.subr.mxu0 0.0
  %190 = vmatpush1.msra.mxu0 0.0
  %191 = vmatprep.subr.mxu0 0.0
  %192 = vmatpush1.msra.mxu0 0.0
  %193 = vmatprep.subr.mxu0 0.0
  %194 = vmatpush1.msra.mxu0 0.0
  %195 = vmatprep.subr.mxu0 0.0
  %196 = vmatpush1.msra.mxu0 0.0
  %197 = vmatprep.subr.mxu0 0.0
  %198 = vmatpush1.msra.mxu0 0.0
  %199 = vmatprep.subr.mxu0 0.0
  %200 = vmatpush1.msra.mxu0 0.0
  %201 = vmatprep.subr.mxu0 0.0
  %202 = vmatpush1.msra.mxu0 0.0
  %203 = vmatprep.subr.mxu0 0.0
  %204 = vmatpush1.msra.mxu0 0.0
  %205 = vmatprep.subr.mxu0 0.0
  %206 = vmatpush1.msra.mxu0 0.0
  %207 = vmatprep.subr.mxu0 0.0
  %208 = vmatpush1.msra.mxu0 0.0
  %209 = vmatprep.subr.mxu0 0.0
  %210 = vmatpush1.msra.mxu0 0.0
  %211 = vmatprep.subr.mxu0 0.0
  %212 = vmatpush1.msra.mxu0 0.0
  %213 = vmatprep.subr.mxu0 0.0
  %214 = vmatpush1.msra.mxu0 %v105
  %215 = vmatprep.subr.mxu0 0.0
  %216 = vmatpush1.msra.mxu0 %v104
  %217 = vmatprep.subr.mxu0 0.0
  %218 = vmatpush2.msra.mxu0 0.0
  %219 = vmatprep.subr.mxu0 0.0
  %220 = vmatpush2.msra.mxu0 0.0
  %221 = vmatprep.subr.mxu0 0.0
  %222 = vmatpush2.msra.mxu0 0.0
  %223 = vmatprep.subr.mxu0 0.0
  %224 = vmatpush2.msra.mxu0 0.0
  %225 = vmatprep.subr.mxu0 0.0
  %226 = vmatpush2.msra.mxu0 0.0
  %227 = vmatprep.subr.mxu0 0.0
  %228 = vmatpush2.msra.mxu0 0.0
  %229 = vmatprep.subr.mxu0 0.0
  %230 = vmatpush2.msra.mxu0 0.0
  %231 = vmatprep.subr.mxu0 0.0
  %232 = vmatpush2.msra.mxu0 0.0
  %233 = vmatprep.subr.mxu0 0.0
  %234 = vmatpush2.msra.mxu0 0.0
  %235 = vmatprep.subr.mxu0 0.0
  %236 = vmatpush2.msra.mxu0 0.0
  %237 = vmatprep.subr.mxu0 0.0
  %238 = vmatpush2.msra.mxu0 0.0
  %239 = vmatprep.subr.mxu0 0.0
  %240 = vmatpush2.msra.mxu0 0.0
  %241 = vmatprep.subr.mxu0 0.0
  %242 = vmatpush2.msra.mxu0 0.0
  %243 = vmatprep.subr.mxu0 0.0
  %244 = vmatpush2.msra.mxu0 0.0
  %245 = vmatprep.subr.mxu0 0.0
  %246 = vmatpush2.msra.mxu0 0.0
  %247 = vmatprep.subr.mxu0 0.0
  %248 = vmatpush2.msra.mxu0 0.0
  %249 = vmatprep.mubr.f32.mxu0 0.0
  %250 = vmatmul.mubr.f32.gmra.mxu0 %v183
  %v251 = vpop.f32.mrf.mxu0
  %v252 = vadd.f32 %v179, %v251
  %v253 = vpop.f32.mrf.mxu0
  %254 = vdwg.mxu0
  %v255 = vld [vmem:[%s4] sm:$0x1]
  %v257 = vlaneseq
  %v258 = vshrl.u32 %v257, 7
  %v259 = vsub.s32 0, %v258
  %v260 = vrot.slane %v255, %v259
  %v262 = vadd.f32 %v252, %v260
  %vm263 = vcmask 31744
  %v264 = vsel %vm263, %v262, -inf
  %265 = vmax.xlane.f32.xlu0 %v264
  %v266 = vpop.xlane.xlu0 %265
  %v267 = vsub.f32 %v262, %v266
  %v268 = vmul.f32 %v267, 1.442695
  %v269 = vpow.pop %v268
  %v270 = vsel %vm263, %v269, 0.0
  %271 = vadd.xlane.f32.xlu0 %v270
  %v272 = vpop.xlane.xlu0 %271
  %v273 = vlog2.pop %v272
  %v274 = vmul.f32 %v273, 0.6931472
  %v275 = vsub.f32 %v267, %v274
  %276 = vst.msk [vmem:[%s5] sm:$0xff] %vm263, %v275
  // Predicated region
  $region22: #{tpu_custom_call.1} parent=0 // pred_check
    _
  $region23: #{tpu_custom_call.1} parent=0 // pred_check_branch
    %278 = sbr.rel (0) target = $region25
  $region24: #{tpu_custom_call.1} parent=0 // pred_region
    _
  $region25: #{tpu_custom_call.1} parent=0 // pred_fallthru
    _
  // Predicated region
  $region26: #{tpu_custom_call.1} parent=0 // pred_check
    _
  $region27: #{tpu_custom_call.1} parent=0 // pred_check_branch
    %280 = sbr.rel (0) target = $region29
  $region28: #{tpu_custom_call.1} parent=0 // pred_region
    _
  $region29: #{tpu_custom_call.1} parent=0 // pred_fallthru
    _

</llo_original>
